<compile_context>
chip_gen: v6e
topology: v6e:2x2x1
jax: 0.10.0
libtpu: 0.0.40
codegen_flags: <defaults>
</compile_context>

<pallas_src>
import math

import jax
import jax.numpy as jnp
from jax.experimental import pallas as pl
from jax.experimental.pallas import tpu as pltpu


# ---------------------------------------------------------------------------
# Kernels
# ---------------------------------------------------------------------------

def _ffn_kernel_f32out(x_ref, w1_ref, w2_ref, b2_ref, o_ref):
    """FFN step when the output dtype is f32: accumulate straight into o_ref."""
    k = pl.program_id(1)

    # linear_1 slab: (tm, d_model) @ (d_model, tf), f32 accumulation on the MXU.
    h = jnp.dot(x_ref[...], w1_ref[...], preferred_element_type=jnp.float32)
    # Dropout: identity (eval-mode nn.Dropout).
    # linear_2 partial contraction over this d_ff slab.
    part = jnp.dot(h.astype(w2_ref.dtype), w2_ref[...],
                   preferred_element_type=jnp.float32)

    @pl.when(k == 0)
    def _():
        o_ref[...] = part + b2_ref[...]

    @pl.when(k != 0)
    def _():
        o_ref[...] = o_ref[...] + part


def _ffn_kernel_scratch(x_ref, w1_ref, w2_ref, b2_ref, o_ref, acc_ref):
    """FFN step with an f32 VMEM accumulator (low-precision outputs)."""
    k = pl.program_id(1)

    @pl.when(k == 0)
    def _():
        acc_ref[...] = jnp.zeros_like(acc_ref)

    h = jnp.dot(x_ref[...], w1_ref[...], preferred_element_type=jnp.float32)
    # Dropout: identity (eval-mode nn.Dropout).
    acc_ref[...] += jnp.dot(h.astype(w2_ref.dtype), w2_ref[...],
                            preferred_element_type=jnp.float32)

    @pl.when(k == pl.num_programs(1) - 1)
    def _():
        o_ref[...] = (acc_ref[...] + b2_ref[...]).astype(o_ref.dtype)


# ---------------------------------------------------------------------------
# Tile selection
# ---------------------------------------------------------------------------

_VMEM_BUDGET = 40 * 1024 * 1024   # conservative: fits v7x's 64 MiB VMEM per TC
_VMEM_LIMIT_CAP = 60 * 1024 * 1024


def _working_set_bytes(tm, tf, d_model, d_ff, cbytes, out_bytes):
    """Double-buffered VMEM working set estimate for one grid step."""
    use_scratch = (out_bytes < 4) and (tf < d_ff)
    w = 2 * tm * d_model * cbytes           # x tile
    w += 2 * d_model * tf * cbytes          # W1 slab
    w += 2 * tf * d_model * cbytes          # W2 slab
    w += 2 * d_model * 4                    # fused bias (f32)
    w += 2 * tm * d_model * out_bytes       # output tile
    w += tm * tf * 4                        # f32 linear_1 intermediate
    if use_scratch:
        w += tm * d_model * 4               # f32 accumulator scratch
    return w


def _choose_tiles(M, d_model, d_ff, cbytes, out_bytes):
    """Pick (tm, tf): biggest tiles whose working set fits the VMEM budget."""
    align = 16 if cbytes < 4 else 8   # packed dtypes want sublane-pair multiples

    if M <= 256:
        tm_cands = [-(-M // align) * align]
    else:
        # Prefer big row tiles (weight-reuse / fewer grid steps) but keep at
        # least 2 M tiles so both v7x TensorCores get work on the parallel axis.
        tm_cands = [t for t in (512, 256, 128) if -(-M // t) >= 2] or [256]
        # TODO(synk): for tiny M on v7x, add a parallel d_model output axis so
        # both TensorCores still get work.

    tf_cands = [d_ff] + [c for c in (2048, 1024, 512, 256, 128)
                         if c < d_ff and d_ff % c == 0]

    for tm in tm_cands:
        for tf in tf_cands:   # tf == d_ff first -> VMEM-resident weights
            if _working_set_bytes(tm, tf, d_model, d_ff, cbytes,
                                  out_bytes) <= _VMEM_BUDGET:
                return tm, tf
    return tm_cands[-1], tf_cands[-1]


# ---------------------------------------------------------------------------
# Wrapper
# ---------------------------------------------------------------------------

def feed_forward_block(x, w1, b1, w2, b2, *, compute_dtype=jnp.bfloat16,
                       tm=None, tf=None):
    """Forward pass of FeedForwardBlock (eval mode).

    x:  (..., d_model)
    w1: (d_model, d_ff)   == linear_1.weight.T
    b1: (d_ff,)           == linear_1.bias
    w2: (d_ff, d_model)   == linear_2.weight.T
    b2: (d_model,)        == linear_2.bias

    compute_dtype: dtype fed to the MXU (bf16 by default; accumulation is
    always f32).  The output keeps x.dtype.
    """
    orig_shape = x.shape
    out_dtype = x.dtype
    d_model = orig_shape[-1]
    d_ff = w1.shape[1]
    assert w1.shape == (d_model, d_ff)
    assert w2.shape == (d_ff, d_model)

    M = 1
    for s in orig_shape[:-1]:
        M *= int(s)

    cbytes = jnp.dtype(compute_dtype).itemsize
    out_bytes = jnp.dtype(out_dtype).itemsize

    auto_tm, auto_tf = _choose_tiles(M, d_model, d_ff, cbytes, out_bytes)
    tm = auto_tm if tm is None else int(tm)
    tf = auto_tf if tf is None else int(tf)
    assert d_ff % tf == 0, "tf must divide d_ff"

    Mp = -(-M // tm) * tm
    n_m_tiles = Mp // tm
    nk = d_ff // tf

    # Cast to the MXU compute dtype in the wrapper (explicit mixed-precision
    # choice; see compute_dtype=jnp.float32 for the bitwise-faithful path).
    x2 = x.reshape(M, d_model).astype(compute_dtype)
    if Mp != M:
        x2 = jnp.pad(x2, ((0, Mp - M), (0, 0)))
    w1c = w1.astype(compute_dtype)
    w2c = w2.astype(compute_dtype)

    # Eval-mode exact fold: (x@W1 + b1)@W2 + b2 == x@W1@W2 + (b1@W2 + b2).
    b2_eff = (b1.astype(jnp.float32) @ w2.astype(jnp.float32)
              + b2.astype(jnp.float32)).reshape(1, d_model)

    use_scratch = (out_dtype != jnp.float32)
    kernel = _ffn_kernel_scratch if use_scratch else _ffn_kernel_f32out
    scratch_shapes = ([pltpu.VMEM((tm, d_model), jnp.float32)]
                      if use_scratch else [])

    work = _working_set_bytes(tm, tf, d_model, d_ff, cbytes, out_bytes)
    vmem_limit = int(min(max(work + (8 << 20), 32 << 20), _VMEM_LIMIT_CAP))

    # Weight blocks are only re-fetched per M tile when the d_ff axis is tiled
    # (block index resets each time k wraps); with tf == d_ff they are DMA'd once.
    weight_reads = n_m_tiles if nk > 1 else 1
    flops = 4 * Mp * d_model * d_ff
    bytes_accessed = (Mp * d_model * cbytes                      # x read
                      + Mp * d_model * out_bytes                 # out write
                      + weight_reads * 2 * d_model * d_ff * cbytes  # W1 + W2
                      + d_model * 4)                             # fused bias

    grid = (n_m_tiles, nk)

    out = pl.pallas_call(
        kernel,
        out_shape=jax.ShapeDtypeStruct((Mp, d_model), out_dtype),
        grid_spec=pltpu.PrefetchScalarGridSpec(
            num_scalar_prefetch=0,
            grid=grid,
            in_specs=[
                pl.BlockSpec((tm, d_model), lambda i, k: (i, 0)),   # x rows
                pl.BlockSpec((d_model, tf), lambda i, k: (0, k)),   # W1 slab
                pl.BlockSpec((tf, d_model), lambda i, k: (k, 0)),   # W2 slab
                pl.BlockSpec((1, d_model), lambda i, k: (0, 0)),    # fused bias
            ],
            out_specs=pl.BlockSpec((tm, d_model), lambda i, k: (i, 0)),
            scratch_shapes=scratch_shapes,
        ),
        compiler_params=pltpu.CompilerParams(
            dimension_semantics=("parallel", "arbitrary"),
            vmem_limit_bytes=vmem_limit,
        ),
        cost_estimate=pl.CostEstimate(
            flops=flops, transcendentals=0, bytes_accessed=bytes_accessed),
    )(x2, w1c, w2c, b2_eff)

    if Mp != M:
        out = out[:M]
    return out.reshape(orig_shape)


# ---------------------------------------------------------------------------
# Self-test
# ---------------------------------------------------------------------------

if __name__ == "__main__":
    d_model = 128
    d_ff = 256
    batch = 2
    seq = 8
    dropout_p = 0.1  # nn.Dropout is identity in eval mode

    key = jax.random.PRNGKey(0)
    kx, k1, k2, k3, k4 = jax.random.split(key, 5)

    x = jax.random.normal(kx, (batch, seq, d_model), dtype=jnp.float32)

    # nn.Linear default init ~ U(-1/sqrt(fan_in), 1/sqrt(fan_in)).
    lim1 = 1.0 / math.sqrt(d_model)
    lim2 = 1.0 / math.sqrt(d_ff)
    w1 = jax.random.uniform(k1, (d_model, d_ff), minval=-lim1, maxval=lim1,
                            dtype=jnp.float32)   # linear_1.weight.T
    b1 = jax.random.uniform(k2, (d_ff,), minval=-lim1, maxval=lim1,
                            dtype=jnp.float32)
    w2 = jax.random.uniform(k3, (d_ff, d_model), minval=-lim2, maxval=lim2,
                            dtype=jnp.float32)   # linear_2.weight.T
    b2 = jax.random.uniform(k4, (d_model,), minval=-lim2, maxval=lim2,
                            dtype=jnp.float32)

    # Plain-JAX reference of the forward pass (eval-mode dropout = identity).
    ref = (x.reshape(-1, d_model) @ w1 + b1) @ w2 + b2
    ref = ref.reshape(batch, seq, d_model)

    # 1) Default path: bf16 MXU matmuls with f32 accumulation.
    out = jax.block_until_ready(feed_forward_block(x, w1, b1, w2, b2))
    assert out.shape == (batch, seq, d_model)
    assert out.dtype == x.dtype
    assert jnp.allclose(out, ref, atol=2e-2, rtol=2e-2)

    # 2) Full-f32 compute path (tight tolerance vs. the f32 reference).
    out_f32 = jax.block_until_ready(
        feed_forward_block(x, w1, b1, w2, b2, compute_dtype=jnp.float32))
    assert jnp.allclose(out_f32, ref, atol=1e-4, rtol=1e-4)

    # 3) bf16 output with a forced d_ff tiling -> exercises the multi-step
    #    reduction with the f32 VMEM scratch accumulator.
    x_bf16 = x.astype(jnp.bfloat16)
    out_bf16 = jax.block_until_ready(
        feed_forward_block(x_bf16, w1, b1, w2, b2, tf=128))
    ref_bf16 = ((x_bf16.astype(jnp.float32).reshape(-1, d_model) @ w1 + b1)
                @ w2 + b2).reshape(batch, seq, d_model)
    assert out_bf16.dtype == jnp.bfloat16
    assert jnp.allclose(out_bf16.astype(jnp.float32), ref_bf16,
                        atol=3e-2, rtol=3e-2)

    print("KERNEL_OK")
</pallas_src>

<mosaic_0001>
module attributes {stable_mosaic.version = 11 : i64} {
  func.func @_ffn_kernel_f32out(%arg0: i32, %arg1: i32, %arg2: memref<16x128xbf16, #tpu.memory_space<vmem>>, %arg3: memref<128x256xbf16, #tpu.memory_space<vmem>>, %arg4: memref<256x128xbf16, #tpu.memory_space<vmem>>, %arg5: memref<1x128xf32, #tpu.memory_space<vmem>>, %arg6: memref<16x128xf32, #tpu.memory_space<vmem>>) attributes {dimension_semantics = [#tpu.dimension_semantics<parallel>, #tpu.dimension_semantics<arbitrary>], iteration_bounds = array<i64: 1, 1>, scalar_prefetch = 0 : i64, scratch_operands = 0 : i64, tpu.core_type = #tpu.core_type<tc>, window_params = [{transform_indices = @transform_0, window_bounds = array<i64: 16, 128>}, {transform_indices = @transform_1, window_bounds = array<i64: 128, 256>}, {transform_indices = @transform_2, window_bounds = array<i64: 256, 128>}, {pipeline_mode = #tpu.pipeline_mode<synchronous>, transform_indices = @transform_3, window_bounds = array<i64: 1, 128>}, {transform_indices = @transform_4, window_bounds = array<i64: 16, 128>}]} {
    %c0 = arith.constant 0 : index
    %c0_0 = arith.constant 0 : index
    %0 = vector.load %arg2[%c0, %c0_0] : memref<16x128xbf16, #tpu.memory_space<vmem>>, vector<16x128xbf16>
    %c0_1 = arith.constant 0 : index
    %c0_2 = arith.constant 0 : index
    %1 = vector.load %arg3[%c0_1, %c0_2] : memref<128x256xbf16, #tpu.memory_space<vmem>>, vector<128x256xbf16>
    %cst = arith.constant dense<0.000000e+00> : vector<16x256xf32>
    %2 = tpu.matmul %0, %1, %cst {dimension_numbers = #tpu.dot_dimension_numbers<[1], [0], [0], [1], [0, 0, 1, 1], [], []>} : vector<16x128xbf16>, vector<128x256xbf16>, vector<16x256xf32> -> vector<16x256xf32>
    %3 = arith.truncf %2 : vector<16x256xf32> to vector<16x256xbf16>
    %c0_3 = arith.constant 0 : index
    %c0_4 = arith.constant 0 : index
    %4 = vector.load %arg4[%c0_3, %c0_4] : memref<256x128xbf16, #tpu.memory_space<vmem>>, vector<256x128xbf16>
    %cst_5 = arith.constant dense<0.000000e+00> : vector<16x128xf32>
    %5 = tpu.matmul %3, %4, %cst_5 {dimension_numbers = #tpu.dot_dimension_numbers<[1], [0], [0], [1], [0, 0, 1, 1], [], []>} : vector<16x256xbf16>, vector<256x128xbf16>, vector<16x128xf32> -> vector<16x128xf32>
    %c0_i32 = arith.constant 0 : i32
    %6 = arith.cmpi eq, %arg1, %c0_i32 : i32
    %7 = arith.extui %6 : i1 to i32
    %c0_i32_6 = arith.constant 0 : i32
    %8 = arith.cmpi ne, %7, %c0_i32_6 : i32
    scf.if %8 {
      %c0_9 = arith.constant 0 : index
      %c0_10 = arith.constant 0 : index
      %12 = vector.load %arg5[%c0_9, %c0_10] : memref<1x128xf32, #tpu.memory_space<vmem>>, vector<1x128xf32>
      %13 = vector.broadcast %12 : vector<1x128xf32> to vector<16x128xf32>
      %14 = arith.addf %5, %13 : vector<16x128xf32>
      %c0_11 = arith.constant 0 : index
      %c0_12 = arith.constant 0 : index
      %15 = vector.load %arg6[%c0_11, %c0_12] : memref<16x128xf32, #tpu.memory_space<vmem>>, vector<16x128xf32>
      tpu.vector_store %arg6[%c0_11, %c0_12], %14 {strides = array<i32>} : memref<16x128xf32, #tpu.memory_space<vmem>>, vector<16x128xf32>,
    } else {
    }
    %c0_i32_7 = arith.constant 0 : i32
    %9 = arith.cmpi ne, %arg1, %c0_i32_7 : i32
    %10 = arith.extui %9 : i1 to i32
    %c0_i32_8 = arith.constant 0 : i32
    %11 = arith.cmpi ne, %10, %c0_i32_8 : i32
    scf.if %11 {
      %c0_9 = arith.constant 0 : index
      %c0_10 = arith.constant 0 : index
      %12 = vector.load %arg6[%c0_9, %c0_10] : memref<16x128xf32, #tpu.memory_space<vmem>>, vector<16x128xf32>
      %13 = arith.addf %12, %5 : vector<16x128xf32>
      %c0_11 = arith.constant 0 : index
      %c0_12 = arith.constant 0 : index
      %14 = vector.load %arg6[%c0_11, %c0_12] : memref<16x128xf32, #tpu.memory_space<vmem>>, vector<16x128xf32>
      tpu.vector_store %arg6[%c0_11, %c0_12], %13 {strides = array<i32>} : memref<16x128xf32, #tpu.memory_space<vmem>>, vector<16x128xf32>,
    } else {
    }
    return
  }
  func.func @transform_0(%arg0: i32, %arg1: i32) -> (i32, i32) {
    %c0_i32 = arith.constant 0 : i32
    %c0_i32_0 = arith.constant 0 : i32
    return %arg0, %c0_i32 : i32, i32
  }
  func.func @transform_1(%arg0: i32, %arg1: i32) -> (i32, i32) {
    %c0_i32 = arith.constant 0 : i32
    %c0_i32_0 = arith.constant 0 : i32
    return %c0_i32, %arg1 : i32, i32
  }
  func.func @transform_2(%arg0: i32, %arg1: i32) -> (i32, i32) {
    %c0_i32 = arith.constant 0 : i32
    %c0_i32_0 = arith.constant 0 : i32
    return %arg1, %c0_i32 : i32, i32
  }
  func.func @transform_3(%arg0: i32, %arg1: i32) -> (i32, i32) {
    %c0_i32 = arith.constant 0 : i32
    %c0_i32_0 = arith.constant 0 : i32
    %c0_i32_1 = arith.constant 0 : i32
    return %c0_i32, %c0_i32_0 : i32, i32
  }
  func.func @transform_4(%arg0: i32, %arg1: i32) -> (i32, i32) {
    %c0_i32 = arith.constant 0 : i32
    %c0_i32_0 = arith.constant 0 : i32
    return %arg0, %c0_i32 : i32, i32
  }
}

</mosaic_0001>

<llo_original>
// kernel: tpu_custom_call.1
$region0: #{tpu_custom_call.1}
  #allocation0 [shape = 'u32[]', space=smem, size = 0x4, offset = 0x4, fixed_abs, tag = 'smem constant byte address 0x4 - core index']
  #allocation1 [shape = 'u32[144,128]{1,0:T(1,128)}', space=vmem, size = 0x12000, scoped, tag = 'internal scratch']
  %s0 = inlined_call_operand.hbm [shape: bf16[16,128], index: 0, kind: input, shape index: {}]
  %s1 = inlined_call_operand.hbm [shape: bf16[128,256], index: 1, kind: input, shape index: {}]
  %s2 = inlined_call_operand.hbm [shape: bf16[256,128], index: 2, kind: input, shape index: {}]
  %s3 = inlined_call_operand.vmem [shape: f32[1,128], index: 3, kind: input, shape index: {}]
  %s4 = inlined_call_operand.hbm [shape: f32[16,128], index: 4, kind: output, shape index: {}]
  %s5 = sld [smem:[#allocation0]]
  $region46: #{tpu_custom_call.1} parent=0
    _
  %s7 = ssub.s32 1, %s5
  %s8 = scalar_select 0, %s7, %s5
  $region1: #{tpu_custom_call.1} parent=0
    #allocation2 [shape = 'u8[4096]{0}', space=vmem, size = 0x1000, scoped, tag = 'input window, operand 0, single buffered']
    #allocation3 [shape = 's32[1]{0}', space=sflag, size = 0x4, scoped, tag = 'scoped memory for tpu_custom_call.1']
    #allocation4 [shape = 's32[1]{0}', space=sflag, size = 0x4, scoped, tag = 'scoped memory for tpu_custom_call.1']
    #allocation5 [shape = 'u8[65536]{0}', space=vmem, size = 0x10000, scoped, tag = 'input window, operand 1, single buffered']
    #allocation6 [shape = 's32[1]{0}', space=sflag, size = 0x4, scoped, tag = 'scoped memory for tpu_custom_call.1']
    #allocation7 [shape = 'u8[65536]{0}', space=vmem, size = 0x10000, scoped, tag = 'input window, operand 2, single buffered']
    #allocation8 [shape = 'u8[8192]{0}', space=vmem, size = 0x2000, scoped, tag = 'output window, operand 0, single buffered']
    %9 = vsyncpa [#allocation3], 0
    %10 = vsyncpa [#allocation6], 0
    %11 = vsyncpa [#allocation4], 0
    // Predicated region
    $region2: #{tpu_custom_call.1} parent=1 // pred_check
      _
    $region3: #{tpu_custom_call.1} parent=1 // pred_check_branch
      %13 = sbr.rel (0) target = $region5
    $region4: #{tpu_custom_call.1} parent=1 // pred_region
      %s15 = ssub.s32 128, 128
      %16 = vsyncadd [#allocation3], %s15
      %s17 = sshll.u32 [#allocation2], 4
      %s18 = int_to_ptr.vmem [resolvable:$true] %s17
      %23 = dma.hbm_to_vmem [thread:$0]  %s0, 128, %s18, [#allocation3], 64, 64, 4
    $region5: #{tpu_custom_call.1} parent=1 // pred_fallthru
      _
    // Predicated region
    $region6: #{tpu_custom_call.1} parent=1 // pred_check
      _
    $region7: #{tpu_custom_call.1} parent=1 // pred_check_branch
      %25 = sbr.rel (0) target = $region9
    $region8: #{tpu_custom_call.1} parent=1 // pred_region
      %s27 = ssub.s32 2048, 2048
      %28 = vsyncadd [#allocation6], %s27
      %s29 = sshll.u32 [#allocation5], 4
      %s30 = int_to_ptr.vmem [resolvable:$true] %s29
      %35 = dma.hbm_to_vmem [thread:$0]  %s1, 2048, %s30, [#allocation6], 128, 128, 8
    $region9: #{tpu_custom_call.1} parent=1 // pred_fallthru
      _
    // Predicated region
    $region10: #{tpu_custom_call.1} parent=1 // pred_check
      _
    $region11: #{tpu_custom_call.1} parent=1 // pred_check_branch
      %37 = sbr.rel (0) target = $region13
    $region12: #{tpu_custom_call.1} parent=1 // pred_region
      %s39 = ssub.s32 2048, 2048
      %40 = vsyncadd [#allocation6], %s39
      %s41 = sshll.u32 [#allocation7], 4
      %s42 = int_to_ptr.vmem [resolvable:$true] %s41
      %47 = dma.hbm_to_vmem [thread:$0]  %s2, 2048, %s42, [#allocation6], 64, 64, 4
    $region13: #{tpu_custom_call.1} parent=1 // pred_fallthru
      _
    // Predicated region
    $region14: #{tpu_custom_call.1} parent=1 // pred_check
      _
    $region15: #{tpu_custom_call.1} parent=1 // pred_check_branch
      %49 = sbr.rel (0) target = $region17
    $region16: #{tpu_custom_call.1} parent=1 // pred_region
      _
    $region17: #{tpu_custom_call.1} parent=1 // pred_fallthru
      _
    // Predicated region
    $region18: #{tpu_custom_call.1} parent=1 // pred_check
      _
    $region19: #{tpu_custom_call.1} parent=1 // pred_check_branch
      %51 = sbr.rel (0) target = $region21
    $region20: #{tpu_custom_call.1} parent=1 // pred_region
      %52 = dma.done [#allocation3], 128
    $region21: #{tpu_custom_call.1} parent=1 // pred_fallthru
      _
    // Predicated region
    $region22: #{tpu_custom_call.1} parent=1 // pred_check
      _
    $region23: #{tpu_custom_call.1} parent=1 // pred_check_branch
      %54 = sbr.rel (0) target = $region25
    $region24: #{tpu_custom_call.1} parent=1 // pred_region
      %55 = dma.done [#allocation6], 2048
    $region25: #{tpu_custom_call.1} parent=1 // pred_fallthru
      _
    // Predicated region
    $region26: #{tpu_custom_call.1} parent=1 // pred_check
      _
    $region27: #{tpu_custom_call.1} parent=1 // pred_check_branch
      %57 = sbr.rel (0) target = $region29
    $region28: #{tpu_custom_call.1} parent=1 // pred_region
      %58 = dma.done [#allocation6], 2048
    $region29: #{tpu_custom_call.1} parent=1 // pred_fallthru
      _
    %v60 = vld [vmem:[#allocation2] sm:$0xf]
    %v61 = vld [vmem:[#allocation2 + $0x4] sm:$0xf]
    %v62 = vld [vmem:[#allocation5] sm:$0xff]
    %v63 = vld [vmem:[#allocation5 + $0x8] sm:$0xff]
    %v64 = vld [vmem:[#allocation5 + $0x10] sm:$0xff]
    %v65 = vld [vmem:[#allocation5 + $0x18] sm:$0xff]
    %v66 = vld [vmem:[#allocation5 + $0x20] sm:$0xff]
    %v67 = vld [vmem:[#allocation5 + $0x28] sm:$0xff]
    %v68 = vld [vmem:[#allocation5 + $0x30] sm:$0xff]
    %v69 = vld [vmem:[#allocation5 + $0x38] sm:$0xff]
    %v70 = vld [vmem:[#allocation5 + $0x40] sm:$0xff]
    %v71 = vld [vmem:[#allocation5 + $0x48] sm:$0xff]
    %v72 = vld [vmem:[#allocation5 + $0x50] sm:$0xff]
    %v73 = vld [vmem:[#allocation5 + $0x58] sm:$0xff]
    %v74 = vld [vmem:[#allocation5 + $0x60] sm:$0xff]
    %v75 = vld [vmem:[#allocation5 + $0x68] sm:$0xff]
    %v76 = vld [vmem:[#allocation5 + $0x70] sm:$0xff]
    %v77 = vld [vmem:[#allocation5 + $0x78] sm:$0xff]
    %v80 = vunpack.c.l.b16 %v60
    %v81 = vunpack.c.l.b16 %v61
    %v82 = vpack.c.b16 %v81, %v80
    %v100 = vunpack.c.l.b16 %v62
    %v101 = vunpack.c.h.b16 %v62
    %v102 = vunpack.c.l.b16 %v63
    %v103 = vunpack.c.h.b16 %v63
    %v104 = vunpack.c.l.b16 %v64
    %v105 = vunpack.c.h.b16 %v64
    %v106 = vunpack.c.l.b16 %v65
    %v107 = vunpack.c.h.b16 %v65
    %v108 = vunpack.c.l.b16 %v66
    %v109 = vunpack.c.h.b16 %v66
    %v110 = vunpack.c.l.b16 %v67
    %v111 = vunpack.c.h.b16 %v67
    %v112 = vunpack.c.l.b16 %v68
    %v113 = vunpack.c.h.b16 %v68
    %v114 = vunpack.c.l.b16 %v69
    %v115 = vunpack.c.h.b16 %v69
    %v116 = vunpack.c.l.b16 %v70
    %v117 = vunpack.c.h.b16 %v70
    %v118 = vunpack.c.l.b16 %v71
    %v119 = vunpack.c.h.b16 %v71
    %v120 = vunpack.c.l.b16 %v72
    %v121 = vunpack.c.h.b16 %v72
    %v122 = vunpack.c.l.b16 %v73
    %v123 = vunpack.c.h.b16 %v73
    %v124 = vunpack.c.l.b16 %v74
    %v125 = vunpack.c.h.b16 %v74
    %v126 = vunpack.c.l.b16 %v75
    %v127 = vunpack.c.h.b16 %v75
    %v128 = vunpack.c.l.b16 %v76
    %v129 = vunpack.c.h.b16 %v76
    %v130 = vunpack.c.l.b16 %v77
    %v131 = vunpack.c.h.b16 %v77
    %v132 = vpack.c.b16 %v102, %v100
    %v133 = vpack.c.b16 %v103, %v101
    %v134 = vpack.c.b16 %v106, %v104
    %v135 = vpack.c.b16 %v107, %v105
    %v136 = vpack.c.b16 %v110, %v108
    %v137 = vpack.c.b16 %v111, %v109
    %v138 = vpack.c.b16 %v114, %v112
    %v139 = vpack.c.b16 %v115, %v113
    %v140 = vpack.c.b16 %v118, %v116
    %v141 = vpack.c.b16 %v119, %v117
    %v142 = vpack.c.b16 %v122, %v120
    %v143 = vpack.c.b16 %v123, %v121
    %v144 = vpack.c.b16 %v126, %v124
    %v145 = vpack.c.b16 %v127, %v125
    %v146 = vpack.c.b16 %v130, %v128
    %v147 = vpack.c.b16 %v131, %v129
    %164 = vmatprep.subr.bf16.mxu0 %v147
    %165 = vmatpush1.bf16.msra.mxu0 %v146
    %166 = vmatprep.subr.bf16.mxu0 %v145
    %167 = vmatpush1.bf16.msra.mxu0 %v144
    %168 = vmatprep.subr.bf16.mxu0 %v143
    %169 = vmatpush1.bf16.msra.mxu0 %v142
    %170 = vmatprep.subr.bf16.mxu0 %v141
    %171 = vmatpush1.bf16.msra.mxu0 %v140
    %172 = vmatprep.subr.bf16.mxu0 %v139
    %173 = vmatpush1.bf16.msra.mxu0 %v138
    %174 = vmatprep.subr.bf16.mxu0 %v137
    %175 = vmatpush1.bf16.msra.mxu0 %v136
    %176 = vmatprep.subr.bf16.mxu0 %v135
    %177 = vmatpush1.bf16.msra.mxu0 %v134
    %178 = vmatprep.subr.bf16.mxu0 %v133
    %179 = vmatpush1.bf16.msra.mxu0 %v132
    %180 = vmatprep.subr.bf16.mxu0 0
    %181 = vmatpush2.bf16.msra.mxu0 0
    %182 = vmatprep.subr.bf16.mxu0 0
    %183 = vmatpush2.bf16.msra.mxu0 0
    %184 = vmatprep.subr.bf16.mxu0 0
    %185 = vmatpush2.bf16.msra.mxu0 0
    %186 = vmatprep.subr.bf16.mxu0 0
    %187 = vmatpush2.bf16.msra.mxu0 0
    %188 = vmatprep.subr.bf16.mxu0 0
    %189 = vmatpush2.bf16.msra.mxu0 0
    %190 = vmatprep.subr.bf16.mxu0 0
    %191 = vmatpush2.bf16.msra.mxu0 0
    %192 = vmatprep.subr.bf16.mxu0 0
    %193 = vmatpush2.bf16.msra.mxu0 0
    %194 = vmatprep.subr.bf16.mxu0 0
    %195 = vmatpush2.bf16.msra.mxu0 0
    %196 = vmatprep.mubr.bf16.mxu0 0
    %197 = vmatmul.mubr.bf16.gmra.mxu0 %v82
    %v198 = vpop.f32.mrf.mxu0
    %v199 = vadd.f32 0.0, %v198
    %v200 = vpop.f32.mrf.mxu0
    %v201 = vadd.f32 0.0, %v200
    %v202 = vpop.f32.mrf.mxu0
    %v203 = vadd.f32 0.0, %v202
    %v204 = vpop.f32.mrf.mxu0
    %v205 = vadd.f32 0.0, %v204
    %206 = vdwg.mxu0
    %v207 = vpack.c.bf16 %v203, %v199
    %v208 = vpack.c.bf16 %v205, %v201
    %v209 = vld [vmem:[#allocation7] sm:$0xf]
    %v210 = vld [vmem:[#allocation7 + $0x4] sm:$0xf]
    %v211 = vld [vmem:[#allocation7 + $0x8] sm:$0xf]
    %v212 = vld [vmem:[#allocation7 + $0xc] sm:$0xf]
    %v213 = vld [vmem:[#allocation7 + $0x10] sm:$0xf]
    %v214 = vld [vmem:[#allocation7 + $0x14] sm:$0xf]
    %v215 = vld [vmem:[#allocation7 + $0x18] sm:$0xf]
    %v216 = vld [vmem:[#allocation7 + $0x1c] sm:$0xf]
    %v217 = vld [vmem:[#allocation7 + $0x20] sm:$0xf]
    %v218 = vld [vmem:[#allocation7 + $0x24] sm:$0xf]
    %v219 = vld [vmem:[#allocation7 + $0x28] sm:$0xf]
    %v220 = vld [vmem:[#allocation7 + $0x2c] sm:$0xf]
    %v221 = vld [vmem:[#allocation7 + $0x30] sm:$0xf]
    %v222 = vld [vmem:[#allocation7 + $0x34] sm:$0xf]
    %v223 = vld [vmem:[#allocation7 + $0x38] sm:$0xf]
    %v224 = vld [vmem:[#allocation7 + $0x3c] sm:$0xf]
    %v225 = vld [vmem:[#allocation7 + $0x40] sm:$0xf]
    %v226 = vld [vmem:[#allocation7 + $0x44] sm:$0xf]
    %v227 = vld [vmem:[#allocation7 + $0x48] sm:$0xf]
    %v228 = vld [vmem:[#allocation7 + $0x4c] sm:$0xf]
    %v229 = vld [vmem:[#allocation7 + $0x50] sm:$0xf]
    %v230 = vld [vmem:[#allocation7 + $0x54] sm:$0xf]
    %v231 = vld [vmem:[#allocation7 + $0x58] sm:$0xf]
    %v232 = vld [vmem:[#allocation7 + $0x5c] sm:$0xf]
    %v233 = vld [vmem:[#allocation7 + $0x60] sm:$0xf]
    %v234 = vld [vmem:[#allocation7 + $0x64] sm:$0xf]
    %v235 = vld [vmem:[#allocation7 + $0x68] sm:$0xf]
    %v236 = vld [vmem:[#allocation7 + $0x6c] sm:$0xf]
    %v237 = vld [vmem:[#allocation7 + $0x70] sm:$0xf]
    %v238 = vld [vmem:[#allocation7 + $0x74] sm:$0xf]
    %v239 = vld [vmem:[#allocation7 + $0x78] sm:$0xf]
    %v240 = vld [vmem:[#allocation7 + $0x7c] sm:$0xf]
    %v273 = vunpack.c.l.b16 %v209
    %v274 = vunpack.c.l.b16 %v210
    %v275 = vunpack.c.l.b16 %v211
    %v276 = vunpack.c.l.b16 %v212
    %v277 = vunpack.c.l.b16 %v213
    %v278 = vunpack.c.l.b16 %v214
    %v279 = vunpack.c.l.b16 %v215
    %v280 = vunpack.c.l.b16 %v216
    %v281 = vunpack.c.l.b16 %v217
    %v282 = vunpack.c.l.b16 %v218
    %v283 = vunpack.c.l.b16 %v219
    %v284 = vunpack.c.l.b16 %v220
    %v285 = vunpack.c.l.b16 %v221
    %v286 = vunpack.c.l.b16 %v222
    %v287 = vunpack.c.l.b16 %v223
    %v288 = vunpack.c.l.b16 %v224
    %v289 = vunpack.c.l.b16 %v225
    %v290 = vunpack.c.l.b16 %v226
    %v291 = vunpack.c.l.b16 %v227
    %v292 = vunpack.c.l.b16 %v228
    %v293 = vunpack.c.l.b16 %v229
    %v294 = vunpack.c.l.b16 %v230
    %v295 = vunpack.c.l.b16 %v231
    %v296 = vunpack.c.l.b16 %v232
    %v297 = vunpack.c.l.b16 %v233
    %v298 = vunpack.c.l.b16 %v234
    %v299 = vunpack.c.l.b16 %v235
    %v300 = vunpack.c.l.b16 %v236
    %v301 = vunpack.c.l.b16 %v237
    %v302 = vunpack.c.l.b16 %v238
    %v303 = vunpack.c.l.b16 %v239
    %v304 = vunpack.c.l.b16 %v240
    %v305 = vpack.c.b16 %v274, %v273
    %v306 = vpack.c.b16 %v276, %v275
    %v307 = vpack.c.b16 %v278, %v277
    %v308 = vpack.c.b16 %v280, %v279
    %v309 = vpack.c.b16 %v282, %v281
    %v310 = vpack.c.b16 %v284, %v283
    %v311 = vpack.c.b16 %v286, %v285
    %v312 = vpack.c.b16 %v288, %v287
    %v313 = vpack.c.b16 %v290, %v289
    %v314 = vpack.c.b16 %v292, %v291
    %v315 = vpack.c.b16 %v294, %v293
    %v316 = vpack.c.b16 %v296, %v295
    %v317 = vpack.c.b16 %v298, %v297
    %v318 = vpack.c.b16 %v300, %v299
    %v319 = vpack.c.b16 %v302, %v301
    %v320 = vpack.c.b16 %v304, %v303
    %337 = vmatprep.subr.bf16.mxu0 0
    %338 = vmatpush1.bf16.msra.mxu0 %v312
    %339 = vmatprep.subr.bf16.mxu0 0
    %340 = vmatpush1.bf16.msra.mxu0 %v311
    %341 = vmatprep.subr.bf16.mxu0 0
    %342 = vmatpush1.bf16.msra.mxu0 %v310
    %343 = vmatprep.subr.bf16.mxu0 0
    %344 = vmatpush1.bf16.msra.mxu0 %v309
    %345 = vmatprep.subr.bf16.mxu0 0
    %346 = vmatpush1.bf16.msra.mxu0 %v308
    %347 = vmatprep.subr.bf16.mxu0 0
    %348 = vmatpush1.bf16.msra.mxu0 %v307
    %349 = vmatprep.subr.bf16.mxu0 0
    %350 = vmatpush1.bf16.msra.mxu0 %v306
    %351 = vmatprep.subr.bf16.mxu0 0
    %352 = vmatpush1.bf16.msra.mxu0 %v305
    %353 = vmatprep.subr.bf16.mxu0 0
    %354 = vmatpush2.bf16.msra.mxu0 %v320
    %355 = vmatprep.subr.bf16.mxu0 0
    %356 = vmatpush2.bf16.msra.mxu0 %v319
    %357 = vmatprep.subr.bf16.mxu0 0
    %358 = vmatpush2.bf16.msra.mxu0 %v318
    %359 = vmatprep.subr.bf16.mxu0 0
    %360 = vmatpush2.bf16.msra.mxu0 %v317
    %361 = vmatprep.subr.bf16.mxu0 0
    %362 = vmatpush2.bf16.msra.mxu0 %v316
    %363 = vmatprep.subr.bf16.mxu0 0
    %364 = vmatpush2.bf16.msra.mxu0 %v315
    %365 = vmatprep.subr.bf16.mxu0 0
    %366 = vmatpush2.bf16.msra.mxu0 %v314
    %367 = vmatprep.subr.bf16.mxu0 0
    %368 = vmatpush2.bf16.msra.mxu0 %v313
    %369 = vmatprep.mubr.bf16.mxu0 %v208
    %370 = vmatmul.mubr.bf16.gmra.mxu0 %v207
    %v371 = vpop.f32.mrf.mxu0
    %v372 = vadd.f32 0.0, %v371
    %v373 = vpop.f32.mrf.mxu0
    %v374 = vpop.f32.mrf.mxu0
    %v375 = vadd.f32 0.0, %v374
    %v376 = vpop.f32.mrf.mxu0
    %377 = vdwg.mxu0
    %p378 = scmp.eq.s32.totalorder 0, 0
    // Predicated region
    $region30: #{tpu_custom_call.1} parent=1 // pred_check
      %p379 = pneg %p378
    $region31: #{tpu_custom_call.1} parent=1 // pred_check_branch
      %381 = sbr.rel (%p379) target = $region33
    $region32: #{tpu_custom_call.1} parent=1 // pred_region
      %v382 = vld [vmem:[%s3] sm:$0x1]
      %v384 = vlaneseq
      %v385 = vshrl.u32 %v384, 7
      %v386 = vsub.s32 0, %v385
      %v387 = vrot.slane %v382, %v386
      %v389 = vadd.f32 %v372, %v387
      %v390 = vadd.f32 %v375, %v387
      %391 = vst [vmem:[#allocation8] sm:$0xff] %v389
      %392 = vst [vmem:[#allocation8 + $0x8] sm:$0xff] %v390
    $region33: #{tpu_custom_call.1} parent=1 // pred_fallthru
      _
    %p393 = scmp.ne.s32.totalorder 0, 0
    // Predicated region
    $region34: #{tpu_custom_call.1} parent=1 // pred_check
      %p394 = pneg %p393
    $region35: #{tpu_custom_call.1} parent=1 // pred_check_branch
      %396 = sbr.rel (%p394) target = $region37
    $region36: #{tpu_custom_call.1} parent=1 // pred_region
      %v397 = vld [vmem:[#allocation8] sm:$0xff]
      %v398 = vld [vmem:[#allocation8 + $0x8] sm:$0xff]
      %v399 = vadd.f32 %v397, %v372
      %v400 = vadd.f32 %v398, %v375
      %401 = vst [vmem:[#allocation8] sm:$0xff] %v399
      %402 = vst [vmem:[#allocation8 + $0x8] sm:$0xff] %v400
    $region37: #{tpu_custom_call.1} parent=1 // pred_fallthru
      _
    // Predicated region
    $region38: #{tpu_custom_call.1} parent=1 // pred_check
      _
    $region39: #{tpu_custom_call.1} parent=1 // pred_check_branch
      %404 = sbr.rel (0) target = $region41
    $region40: #{tpu_custom_call.1} parent=1 // pred_region
      %s406 = ssub.s32 256, 256
      %407 = vsyncadd [#allocation4], %s406
      %s408 = sshll.u32 [#allocation8], 4
      %s409 = int_to_ptr.vmem [resolvable:$true] %s408
      %414 = dma.vmem_to_hbm [thread:$0]  %s409, 256, %s4, [#allocation4], 128, 128, 8
    $region41: #{tpu_custom_call.1} parent=1 // pred_fallthru
      _
    // Predicated region
    $region42: #{tpu_custom_call.1} parent=1 // pred_check
      _
    $region43: #{tpu_custom_call.1} parent=1 // pred_check_branch
      %416 = sbr.rel (0) target = $region45
    $region44: #{tpu_custom_call.1} parent=1 // pred_region
      %417 = dma.done [#allocation4], 256
    $region45: #{tpu_custom_call.1} parent=1 // pred_fallthru
      _
    %418 = vsyncpa [#allocation3], 1
    %419 = vsyncpa [#allocation6], 1
    %420 = vsyncpa [#allocation4], 1

</llo_original>
